<compile_context>
chip_gen: v5e
topology: v5e:2x2
jax: 0.10.0
libtpu: 0.0.40
codegen_flags: <defaults>
</compile_context>

<pallas_src>
import functools

import numpy as np

import jax
import jax.numpy as jnp
from jax.experimental import pallas as pl
from jax.experimental.pallas import tpu as pltpu

_LANE = 128   # lane width (last dim)
_SUBLANE = 8  # f32 sublane (second-to-last dim)


def _round_up(x: int, m: int) -> int:
    return ((x + m - 1) // m) * m


@functools.lru_cache(maxsize=1)
def _vmem_capacity_bytes() -> int:
    """Physical VMEM per core (v5e/v6e: 128 MiB, v7x: 64 MiB)."""
    try:
        return int(pltpu.get_tpu_info().vmem_capacity_bytes)
    except Exception:
        return 64 << 20  # conservative fallback (v7x per-TensorCore)


@functools.lru_cache(maxsize=1)
def _single_buffer_supported() -> bool:
    """Probe once whether pipeline_mode=pl.Buffered(1) lowers on this backend."""
    def k(a_ref, b_ref, o_ref):
        o_ref[...] = a_ref[...] + b_ref[...]
    try:
        f = pl.pallas_call(
            k,
            out_shape=jax.ShapeDtypeStruct((_SUBLANE, _LANE), jnp.float32),
            grid=(1,),
            in_specs=[
                pl.BlockSpec((_SUBLANE, _LANE), lambda i: (0, 0)),
                pl.BlockSpec((_SUBLANE, _LANE), lambda i: (0, 0),
                             pipeline_mode=pl.Buffered(1)),
            ],
            out_specs=pl.BlockSpec((_SUBLANE, _LANE), lambda i: (i, 0)),
        )
        z = jnp.zeros((_SUBLANE, _LANE), jnp.float32)
        jax.jit(f).lower(z, z).compile()
        return True
    except Exception:
        return False


def _mlp_kernel(x_ref, w1_ref, b1_ref, w2_ref, b2_ref, o_ref):
    # fc1: [TB, D] @ [D, Hp] on the MXU, f32 accumulation.  The (optional)
    # bf16 cast of x happens here on the VPU, so x is DMA'd at natural width.
    x = x_ref[...].astype(w1_ref.dtype)
    h = jnp.dot(x, w1_ref[...], preferred_element_type=jnp.float32)
    # Bias add + ReLU in f32 on the VPU (free while MXU/DMA are the bound).
    h = jnp.maximum(h + b1_ref[...], 0.0)
    # fc2: [TB, Hp] @ [Hp, Cp]; feed the MXU in the weights' compute dtype.
    out = jnp.dot(h.astype(w2_ref.dtype), w2_ref[...],
                  preferred_element_type=jnp.float32)
    o_ref[...] = (out + b2_ref[...]).astype(o_ref.dtype)


def prepare_params(w1, b1, w2, b2, *, use_bf16=False):
    """Pad lane (last) dims H and C to multiples of 128 and cast the weights
    ONCE, at init time (hoisted out of the per-call forward path).

    Zero padding is exact: padded hidden units get bias 0 -> ReLU 0 ->
    contribute 0; padded output columns are sliced off by the wrapper.
    The fc1 contraction dim D is deliberately NOT padded (the MXU pads K
    internally), so x never needs a padded copy.

    w1: [D, H] (transposed vs. PyTorch), b1: [H] or [1, H]
    w2: [H, C] (transposed vs. PyTorch), b2: [C] or [1, C]
    """
    D, H = w1.shape
    H2, C = w2.shape
    assert H2 == H, "w1/w2 hidden dims disagree"
    Hp = _round_up(H, _LANE)
    Cp = _round_up(C, _LANE)
    wdt = jnp.bfloat16 if use_bf16 else jnp.float32
    w1_p = jnp.zeros((D, Hp), wdt).at[:, :H].set(w1.astype(wdt))
    w2_p = jnp.zeros((Hp, Cp), wdt).at[:H, :C].set(w2.astype(wdt))
    b1_p = jnp.zeros((1, Hp), jnp.float32).at[:, :H].set(
        jnp.reshape(b1, (1, H)).astype(jnp.float32))
    b2_p = jnp.zeros((1, Cp), jnp.float32).at[:, :C].set(
        jnp.reshape(b2, (1, C)).astype(jnp.float32))
    return w1_p, b1_p, w2_p, b2_p


def _derive_tiling(B, D, Hp, Cp, w_itemsize, x_itemsize, out_itemsize,
                   batch_tile, single_buffer):
    """Pick the batch tile + vmem_limit from the per-generation VMEM budget."""
    cap = _vmem_capacity_bytes()
    wbuf = 1 if single_buffer else 2
    # Resident weights + biases (per buffer copy; biases pad to 8 sublanes).
    weight_bytes = ((_round_up(D, _SUBLANE) * Hp + Hp * Cp) * w_itemsize
                    + (Hp + Cp) * _SUBLANE * 4) * wbuf
    # Double-buffered (pipelined) x and out tiles, per batch row.
    per_row = 2 * (D * x_itemsize + Cp * out_itemsize)

    if batch_tile is not None:
        if batch_tile <= 0 or batch_tile % _SUBLANE:
            raise ValueError(
                f"batch_tile must be a positive multiple of {_SUBLANE}, got {batch_tile}")
        tb = batch_tile
    else:
        budget = (3 * cap) // 4                      # leave headroom vs. physical
        avail = budget - weight_bytes
        tb = (max(avail, 0) // per_row) // _SUBLANE * _SUBLANE
        tb = max(_SUBLANE, min(tb, 1024))
        # Keep >=2 grid steps once the batch is big enough so the "parallel"
        # axis can actually shard across v7x's two TensorCores.
        tb = min(tb, max(_round_up(max(B // 2, 1), _SUBLANE), _SUBLANE))
        # Never larger than the (sublane-rounded) batch itself.
        tb = min(tb, _round_up(B, _SUBLANE))

    vmem_limit = weight_bytes + per_row * tb + (4 << 20)   # + compiler scratch headroom
    vmem_limit = min(max(vmem_limit, 32 << 20), (9 * cap) // 10)
    return tb, int(vmem_limit)


@functools.partial(
    jax.jit,
    static_argnames=("num_classes", "batch_tile", "vmem_limit_bytes",
                     "out_dtype", "single_buffer_weights"))
def _forward_jit(x, w1_p, b1_p, w2_p, b2_p, *, num_classes, batch_tile,
                 vmem_limit_bytes, out_dtype, single_buffer_weights):
    B, D = x.shape
    Hp = w1_p.shape[1]
    Cp = w2_p.shape[1]
    TB = batch_tile
    Bp = _round_up(max(B, TB), TB)

    # Only the batch axis is (possibly) padded; D stays at its natural width.
    if Bp != B:
        x = jnp.pad(x, ((0, Bp - B), (0, 0)))

    # Constant-index blocks never change -> single-buffer them when supported.
    resident = pl.Buffered(1) if single_buffer_weights else None

    out_p = pl.pallas_call(
        _mlp_kernel,
        out_shape=jax.ShapeDtypeStruct((Bp, Cp), out_dtype),
        grid=(Bp // TB,),
        in_specs=[
            # x tile marches along the batch axis (software-pipelined DMA).
            pl.BlockSpec((TB, D), lambda i: (i, 0)),
            # Weights / biases: whole array, same block every step ->
            # VMEM-resident across the grid.
            pl.BlockSpec((D, Hp), lambda i: (0, 0), pipeline_mode=resident),
            pl.BlockSpec((1, Hp), lambda i: (0, 0), pipeline_mode=resident),
            pl.BlockSpec((Hp, Cp), lambda i: (0, 0), pipeline_mode=resident),
            pl.BlockSpec((1, Cp), lambda i: (0, 0), pipeline_mode=resident),
        ],
        out_specs=pl.BlockSpec((TB, Cp), lambda i: (i, 0)),
        compiler_params=pltpu.CompilerParams(
            # Independent batch tiles: shard across both TCs on v7x.
            dimension_semantics=("parallel",),
            vmem_limit_bytes=vmem_limit_bytes,
        ),
    )(x, w1_p, b1_p, w2_p, b2_p)

    return out_p[:B, :num_classes]


def net_forward(x, params, *, num_classes=None, batch_tile=None,
                out_dtype=jnp.float32):
    """Pallas forward for Net: fc2(relu(fc1(x))).

    `params` is the tuple returned by `prepare_params` (pad/cast once at init;
    do NOT rebuild it every call).  Returns [B, num_classes] in `out_dtype`.
    """
    w1_p, b1_p, w2_p, b2_p = params
    if num_classes is None:
        num_classes = w2_p.shape[1]   # exact only if C was already a 128-multiple
    B, D = x.shape
    single_buf = _single_buffer_supported()
    TB, vmem_limit = _derive_tiling(
        B, D, w1_p.shape[1], w2_p.shape[1],
        np.dtype(w1_p.dtype).itemsize, np.dtype(x.dtype).itemsize,
        np.dtype(out_dtype).itemsize, batch_tile, single_buf)
    return _forward_jit(x, w1_p, b1_p, w2_p, b2_p,
                        num_classes=int(num_classes), batch_tile=TB,
                        vmem_limit_bytes=vmem_limit, out_dtype=out_dtype,
                        single_buffer_weights=single_buf)


def init_params(key, input_size, hidden_size, num_classes):
    """Deterministic init mimicking PyTorch nn.Linear default
    (U[-1/sqrt(fan_in), 1/sqrt(fan_in)])."""
    k1, k2, k3, k4 = jax.random.split(key, 4)
    lim1 = 1.0 / jnp.sqrt(jnp.float32(input_size))
    lim2 = 1.0 / jnp.sqrt(jnp.float32(hidden_size))
    w1 = jax.random.uniform(k1, (input_size, hidden_size), jnp.float32, -lim1, lim1)
    b1 = jax.random.uniform(k2, (1, hidden_size), jnp.float32, -lim1, lim1)
    w2 = jax.random.uniform(k3, (hidden_size, num_classes), jnp.float32, -lim2, lim2)
    b2 = jax.random.uniform(k4, (1, num_classes), jnp.float32, -lim2, lim2)
    return w1, b1, w2, b2


if __name__ == "__main__":
    # Small shapes consistent with the module: batch=8, input=32, hidden=32, classes=16.
    B, INPUT_SIZE, HIDDEN_SIZE, NUM_CLASSES = 8, 32, 32, 16

    key = jax.random.PRNGKey(0)
    kx, kp = jax.random.split(key)
    x = jax.random.normal(kx, (B, INPUT_SIZE), jnp.float32)
    w1, b1, w2, b2 = init_params(kp, INPUT_SIZE, HIDDEN_SIZE, NUM_CLASSES)

    # --- default f32 path: must match the pure-f32 reference tightly. ---
    params_f32 = prepare_params(w1, b1, w2, b2, use_bf16=False)
    out_f32 = jax.block_until_ready(
        net_forward(x, params_f32, num_classes=NUM_CLASSES))
    ref_f32 = jnp.maximum(x @ w1 + b1, 0.0) @ w2 + b2
    assert out_f32.shape == (B, NUM_CLASSES)
    assert out_f32.dtype == jnp.float32
    assert jnp.allclose(out_f32, ref_f32, atol=1e-5, rtol=1e-5)

    # --- opt-in bf16-MXU path (f32 accumulation): compare against the matching
    # bf16-input reference with a tolerance covering accumulation-order diffs. ---
    params_bf16 = prepare_params(w1, b1, w2, b2, use_bf16=True)
    out_bf16 = jax.block_until_ready(
        net_forward(x, params_bf16, num_classes=NUM_CLASSES))
    xb, w1b, w2b = (a.astype(jnp.bfloat16) for a in (x, w1, w2))
    h_ref = jnp.maximum(
        jnp.dot(xb, w1b, preferred_element_type=jnp.float32) + b1, 0.0)
    ref_bf16 = jnp.dot(h_ref.astype(jnp.bfloat16), w2b,
                       preferred_element_type=jnp.float32) + b2
    assert out_bf16.shape == (B, NUM_CLASSES)
    assert jnp.allclose(out_bf16, ref_bf16, atol=1e-2, rtol=1e-2)
    # bf16 inputs vs. the full-f32 reference: loose sanity bound only.
    assert jnp.allclose(out_bf16, ref_f32, atol=5e-2, rtol=5e-2)

    print("KERNEL_OK")
</pallas_src>

<mosaic_0001>
module attributes {stable_mosaic.version = 11 : i64} {
  func.func @_mlp_kernel(%arg0: i32, %arg1: memref<8x32xf32, #tpu.memory_space<vmem>>, %arg2: memref<32x128xf32, #tpu.memory_space<vmem>>, %arg3: memref<1x128xf32, #tpu.memory_space<vmem>>, %arg4: memref<128x128xf32, #tpu.memory_space<vmem>>, %arg5: memref<1x128xf32, #tpu.memory_space<vmem>>, %arg6: memref<8x128xf32, #tpu.memory_space<vmem>>) attributes {dimension_semantics = [#tpu.dimension_semantics<parallel>], iteration_bounds = array<i64: 1>, scalar_prefetch = 0 : i64, scratch_operands = 0 : i64, tpu.core_type = #tpu.core_type<tc>, window_params = [{transform_indices = @transform_0, window_bounds = array<i64: 8, 32>}, {pipeline_mode = #tpu.pipeline_mode<synchronous>, transform_indices = @transform_1, window_bounds = array<i64: 32, 128>}, {pipeline_mode = #tpu.pipeline_mode<synchronous>, transform_indices = @transform_2, window_bounds = array<i64: 1, 128>}, {pipeline_mode = #tpu.pipeline_mode<synchronous>, transform_indices = @transform_3, window_bounds = array<i64: 128, 128>}, {pipeline_mode = #tpu.pipeline_mode<synchronous>, transform_indices = @transform_4, window_bounds = array<i64: 1, 128>}, {transform_indices = @transform_5, window_bounds = array<i64: 8, 128>}]} {
    %c0 = arith.constant 0 : index
    %c0_0 = arith.constant 0 : index
    %0 = vector.load %arg1[%c0, %c0_0] : memref<8x32xf32, #tpu.memory_space<vmem>>, vector<8x32xf32>
    %c0_1 = arith.constant 0 : index
    %c0_2 = arith.constant 0 : index
    %1 = vector.load %arg2[%c0_1, %c0_2] : memref<32x128xf32, #tpu.memory_space<vmem>>, vector<32x128xf32>
    %cst = arith.constant dense<0.000000e+00> : vector<8x128xf32>
    %2 = tpu.matmul %0, %1, %cst {dimension_numbers = #tpu.dot_dimension_numbers<[1], [0], [0], [1], [0, 0, 1, 1], [], []>} : vector<8x32xf32>, vector<32x128xf32>, vector<8x128xf32> -> vector<8x128xf32>
    %c0_3 = arith.constant 0 : index
    %c0_4 = arith.constant 0 : index
    %3 = vector.load %arg3[%c0_3, %c0_4] : memref<1x128xf32, #tpu.memory_space<vmem>>, vector<1x128xf32>
    %4 = vector.broadcast %3 : vector<1x128xf32> to vector<8x128xf32>
    %5 = arith.addf %2, %4 : vector<8x128xf32>
    %cst_5 = arith.constant 0.000000e+00 : f32
    %6 = vector.broadcast %cst_5 : f32 to vector<8x128xf32>
    %7 = arith.maximumf %5, %6 : vector<8x128xf32>
    %c0_6 = arith.constant 0 : index
    %c0_7 = arith.constant 0 : index
    %8 = vector.load %arg4[%c0_6, %c0_7] : memref<128x128xf32, #tpu.memory_space<vmem>>, vector<128x128xf32>
    %cst_8 = arith.constant dense<0.000000e+00> : vector<8x128xf32>
    %9 = tpu.matmul %7, %8, %cst_8 {dimension_numbers = #tpu.dot_dimension_numbers<[1], [0], [0], [1], [0, 0, 1, 1], [], []>} : vector<8x128xf32>, vector<128x128xf32>, vector<8x128xf32> -> vector<8x128xf32>
    %c0_9 = arith.constant 0 : index
    %c0_10 = arith.constant 0 : index
    %10 = vector.load %arg5[%c0_9, %c0_10] : memref<1x128xf32, #tpu.memory_space<vmem>>, vector<1x128xf32>
    %11 = vector.broadcast %10 : vector<1x128xf32> to vector<8x128xf32>
    %12 = arith.addf %9, %11 : vector<8x128xf32>
    %c0_11 = arith.constant 0 : index
    %c0_12 = arith.constant 0 : index
    %13 = vector.load %arg6[%c0_11, %c0_12] : memref<8x128xf32, #tpu.memory_space<vmem>>, vector<8x128xf32>
    tpu.vector_store %arg6[%c0_11, %c0_12], %12 {strides = array<i32>} : memref<8x128xf32, #tpu.memory_space<vmem>>, vector<8x128xf32>,
    return
  }
  func.func @transform_0(%arg0: i32) -> (i32, i32) {
    %c0_i32 = arith.constant 0 : i32
    %c0_i32_0 = arith.constant 0 : i32
    return %arg0, %c0_i32 : i32, i32
  }
  func.func @transform_1(%arg0: i32) -> (i32, i32) {
    %c0_i32 = arith.constant 0 : i32
    %c0_i32_0 = arith.constant 0 : i32
    %c0_i32_1 = arith.constant 0 : i32
    return %c0_i32, %c0_i32_0 : i32, i32
  }
  func.func @transform_2(%arg0: i32) -> (i32, i32) {
    %c0_i32 = arith.constant 0 : i32
    %c0_i32_0 = arith.constant 0 : i32
    %c0_i32_1 = arith.constant 0 : i32
    return %c0_i32, %c0_i32_0 : i32, i32
  }
  func.func @transform_3(%arg0: i32) -> (i32, i32) {
    %c0_i32 = arith.constant 0 : i32
    %c0_i32_0 = arith.constant 0 : i32
    %c0_i32_1 = arith.constant 0 : i32
    return %c0_i32, %c0_i32_0 : i32, i32
  }
  func.func @transform_4(%arg0: i32) -> (i32, i32) {
    %c0_i32 = arith.constant 0 : i32
    %c0_i32_0 = arith.constant 0 : i32
    %c0_i32_1 = arith.constant 0 : i32
    return %c0_i32, %c0_i32_0 : i32, i32
  }
  func.func @transform_5(%arg0: i32) -> (i32, i32) {
    %c0_i32 = arith.constant 0 : i32
    %c0_i32_0 = arith.constant 0 : i32
    return %arg0, %c0_i32 : i32, i32
  }
}

</mosaic_0001>

<llo_original>
// kernel: _forward_jit.1
$region0: #{_forward_jit.1}
  #allocation0 [shape = 'u32[]', space=smem, size = 0x4, offset = 0x4, fixed_abs, tag = 'smem constant byte address 0x4 - core index']
  #allocation1 [shape = 'u32[72,128]{1,0:T(1,128)}', space=vmem, size = 0x9000, scoped, tag = 'internal scratch']
  %s0 = inlined_call_operand.hbm [shape: f32[8,32], index: 0, kind: input, shape index: {}]
  %s1 = inlined_call_operand.hbm [shape: f32[32,128], index: 1, kind: input, shape index: {}]
  %s2 = inlined_call_operand.vmem [shape: f32[1,128], index: 2, kind: input, shape index: {}]
  %s3 = inlined_call_operand.hbm [shape: f32[128,128], index: 3, kind: input, shape index: {}]
  %s4 = inlined_call_operand.vmem [shape: f32[1,128], index: 4, kind: input, shape index: {}]
  %s5 = inlined_call_operand.hbm [shape: f32[8,128], index: 5, kind: output, shape index: {}]
  %s6 = sld [smem:[#allocation0]]
  $region42: #{_forward_jit.1} parent=0
    _
  %s8 = ssub.s32 1, %s6
  %s9 = scalar_select 0, %s8, %s6
  $region1: #{_forward_jit.1} parent=0
    #allocation2 [shape = 'u8[4096]{0}', space=vmem, size = 0x1000, scoped, tag = 'input window, operand 0, single buffered']
    #allocation3 [shape = 's32[1]{0}', space=sflag, size = 0x4, scoped, tag = 'scoped memory for _forward_jit.1']
    #allocation4 [shape = 's32[1]{0}', space=sflag, size = 0x4, scoped, tag = 'scoped memory for _forward_jit.1']
    #allocation5 [shape = 'u8[16384]{0}', space=vmem, size = 0x4000, scoped, tag = 'input window, operand 1, single buffered']
    #allocation6 [shape = 's32[1]{0}', space=sflag, size = 0x4, scoped, tag = 'scoped memory for _forward_jit.1']
    #allocation7 [shape = 'u8[65536]{0}', space=vmem, size = 0x10000, scoped, tag = 'input window, operand 3, single buffered']
    #allocation8 [shape = 'u8[4096]{0}', space=vmem, size = 0x1000, scoped, tag = 'output window, operand 0, single buffered']
    %10 = vsyncpa [#allocation3], 0
    %11 = vsyncpa [#allocation6], 0
    %12 = vsyncpa [#allocation4], 0
    // Predicated region
    $region2: #{_forward_jit.1} parent=1 // pred_check
      _
    $region3: #{_forward_jit.1} parent=1 // pred_check_branch
      %14 = sbr.rel (0) target = $region5
    $region4: #{_forward_jit.1} parent=1 // pred_region
      %16 = vsyncadd [#allocation3], 0
      %s18 = sshll.u32 %s0, 4
      %s19 = int_to_ptr.hbm [resolvable:$true] %s18
      %s20 = sshll.u32 [#allocation2], 4
      %s21 = int_to_ptr.vmem [resolvable:$true] %s20
      %23 = dma.hbm_to_vmem [thread:$0]  %s19, 128, %s21, [#allocation3]
    $region5: #{_forward_jit.1} parent=1 // pred_fallthru
      _
    // Predicated region
    $region6: #{_forward_jit.1} parent=1 // pred_check
      _
    $region7: #{_forward_jit.1} parent=1 // pred_check_branch
      %25 = sbr.rel (0) target = $region9
    $region8: #{_forward_jit.1} parent=1 // pred_region
      %27 = vsyncadd [#allocation6], 0
      %s28 = sshll.u32 %s1, 4
      %s29 = int_to_ptr.hbm [resolvable:$true] %s28
      %s30 = sshll.u32 [#allocation5], 4
      %s31 = int_to_ptr.vmem [resolvable:$true] %s30
      %36 = dma.hbm_to_vmem [thread:$0]  %s29, 512, %s31, [#allocation6], 128, 128, 8
    $region9: #{_forward_jit.1} parent=1 // pred_fallthru
      _
    // Predicated region
    $region10: #{_forward_jit.1} parent=1 // pred_check
      _
    $region11: #{_forward_jit.1} parent=1 // pred_check_branch
      %38 = sbr.rel (0) target = $region13
    $region12: #{_forward_jit.1} parent=1 // pred_region
      _
    $region13: #{_forward_jit.1} parent=1 // pred_fallthru
      _
    // Predicated region
    $region14: #{_forward_jit.1} parent=1 // pred_check
      _
    $region15: #{_forward_jit.1} parent=1 // pred_check_branch
      %40 = sbr.rel (0) target = $region17
    $region16: #{_forward_jit.1} parent=1 // pred_region
      %42 = vsyncadd [#allocation6], 0
      %s43 = sshll.u32 %s3, 4
      %s44 = int_to_ptr.hbm [resolvable:$true] %s43
      %s45 = sshll.u32 [#allocation7], 4
      %s46 = int_to_ptr.vmem [resolvable:$true] %s45
      %51 = dma.hbm_to_vmem [thread:$0]  %s44, 2048, %s46, [#allocation6], 128, 128, 8
    $region17: #{_forward_jit.1} parent=1 // pred_fallthru
      _
    // Predicated region
    $region18: #{_forward_jit.1} parent=1 // pred_check
      _
    $region19: #{_forward_jit.1} parent=1 // pred_check_branch
      %53 = sbr.rel (0) target = $region21
    $region20: #{_forward_jit.1} parent=1 // pred_region
      _
    $region21: #{_forward_jit.1} parent=1 // pred_fallthru
      _
    // Predicated region
    $region22: #{_forward_jit.1} parent=1 // pred_check
      _
    $region23: #{_forward_jit.1} parent=1 // pred_check_branch
      %55 = sbr.rel (0) target = $region25
    $region24: #{_forward_jit.1} parent=1 // pred_region
      %57 = dma.done [#allocation3], 128
    $region25: #{_forward_jit.1} parent=1 // pred_fallthru
      _
    // Predicated region
    $region26: #{_forward_jit.1} parent=1 // pred_check
      _
    $region27: #{_forward_jit.1} parent=1 // pred_check_branch
      %59 = sbr.rel (0) target = $region29
    $region28: #{_forward_jit.1} parent=1 // pred_region
      %61 = dma.done [#allocation6], 512
    $region29: #{_forward_jit.1} parent=1 // pred_fallthru
      _
    // Predicated region
    $region30: #{_forward_jit.1} parent=1 // pred_check
      _
    $region31: #{_forward_jit.1} parent=1 // pred_check_branch
      %63 = sbr.rel (0) target = $region33
    $region32: #{_forward_jit.1} parent=1 // pred_region
      %65 = dma.done [#allocation6], 2048
    $region33: #{_forward_jit.1} parent=1 // pred_fallthru
      _
    %v66 = vld [vmem:[#allocation2] sm:$0xff]
    %v67 = vld [vmem:[#allocation5] sm:$0xff]
    %v68 = vld [vmem:[#allocation5 + $0x8] sm:$0xff]
    %v69 = vld [vmem:[#allocation5 + $0x10] sm:$0xff]
    %v70 = vld [vmem:[#allocation5 + $0x18] sm:$0xff]
    %v71 = vld [vmem:[%s2] sm:$0x1]
    %v73 = vperm.slane %v71, 0
    %vm75 = vcmask 261120
    %v77 = vsel %vm75, %v66, 0
    %79 = vmatpush.msra.mxu0 0.0
    %80 = vmatpush.msra.mxu0 0.0
    %81 = vmatpush.msra.mxu0 0.0
    %82 = vmatpush.msra.mxu0 0.0
    %83 = vmatpush.msra.mxu0 0.0
    %84 = vmatpush.msra.mxu0 0.0
    %85 = vmatpush.msra.mxu0 0.0
    %86 = vmatpush.msra.mxu0 0.0
    %87 = vmatpush.msra.mxu0 0.0
    %88 = vmatpush.msra.mxu0 0.0
    %89 = vmatpush.msra.mxu0 0.0
    %90 = vmatpush.msra.mxu0 0.0
    %91 = vmatpush.msra.mxu0 %v70
    %92 = vmatpush.msra.mxu0 %v69
    %93 = vmatpush.msra.mxu0 %v68
    %94 = vmatpush.msra.mxu0 %v67
    %95 = vmatmul.f32.gmra.mxu0 %v77
    %v96 = vpop.f32.mrf.mxu0
    %v97 = vadd.f32 %v73, %v96
    %98 = vdwg.mxu0
    %v99 = vmax.f32 %v97, 0.0
    %v100 = vld [vmem:[#allocation7] sm:$0xff]
    %v101 = vld [vmem:[#allocation7 + $0x8] sm:$0xff]
    %v102 = vld [vmem:[#allocation7 + $0x10] sm:$0xff]
    %v103 = vld [vmem:[#allocation7 + $0x18] sm:$0xff]
    %v104 = vld [vmem:[#allocation7 + $0x20] sm:$0xff]
    %v105 = vld [vmem:[#allocation7 + $0x28] sm:$0xff]
    %v106 = vld [vmem:[#allocation7 + $0x30] sm:$0xff]
    %v107 = vld [vmem:[#allocation7 + $0x38] sm:$0xff]
    %v108 = vld [vmem:[#allocation7 + $0x40] sm:$0xff]
    %v109 = vld [vmem:[#allocation7 + $0x48] sm:$0xff]
    %v110 = vld [vmem:[#allocation7 + $0x50] sm:$0xff]
    %v111 = vld [vmem:[#allocation7 + $0x58] sm:$0xff]
    %v112 = vld [vmem:[#allocation7 + $0x60] sm:$0xff]
    %v113 = vld [vmem:[#allocation7 + $0x68] sm:$0xff]
    %v114 = vld [vmem:[#allocation7 + $0x70] sm:$0xff]
    %v115 = vld [vmem:[#allocation7 + $0x78] sm:$0xff]
    %v116 = vld [vmem:[%s4] sm:$0x1]
    %v118 = vperm.slane %v116, 0
    %120 = vmatpush.msra.mxu0 %v115
    %121 = vmatpush.msra.mxu0 %v114
    %122 = vmatpush.msra.mxu0 %v113
    %123 = vmatpush.msra.mxu0 %v112
    %124 = vmatpush.msra.mxu0 %v111
    %125 = vmatpush.msra.mxu0 %v110
    %126 = vmatpush.msra.mxu0 %v109
    %127 = vmatpush.msra.mxu0 %v108
    %128 = vmatpush.msra.mxu0 %v107
    %129 = vmatpush.msra.mxu0 %v106
    %130 = vmatpush.msra.mxu0 %v105
    %131 = vmatpush.msra.mxu0 %v104
    %132 = vmatpush.msra.mxu0 %v103
    %133 = vmatpush.msra.mxu0 %v102
    %134 = vmatpush.msra.mxu0 %v101
    %135 = vmatpush.msra.mxu0 %v100
    %136 = vmatmul.f32.gmra.mxu0 %v99
    %v137 = vpop.f32.mrf.mxu0
    %v138 = vadd.f32 %v118, %v137
    %139 = vdwg.mxu0
    %140 = vst [vmem:[#allocation8] sm:$0xff] %v138
    // Predicated region
    $region34: #{_forward_jit.1} parent=1 // pred_check
      _
    $region35: #{_forward_jit.1} parent=1 // pred_check_branch
      %142 = sbr.rel (0) target = $region37
    $region36: #{_forward_jit.1} parent=1 // pred_region
      %144 = vsyncadd [#allocation4], 0
      %s146 = sshll.u32 [#allocation8], 4
      %s147 = int_to_ptr.vmem [resolvable:$true] %s146
      %s148 = sshll.u32 %s5, 4
      %s149 = int_to_ptr.hbm [resolvable:$true] %s148
      %151 = dma.vmem_to_hbm [thread:$0]  %s147, 128, %s149, [#allocation4]
    $region37: #{_forward_jit.1} parent=1 // pred_fallthru
      _
    // Predicated region
    $region38: #{_forward_jit.1} parent=1 // pred_check
      _
    $region39: #{_forward_jit.1} parent=1 // pred_check_branch
      %153 = sbr.rel (0) target = $region41
    $region40: #{_forward_jit.1} parent=1 // pred_region
      %155 = dma.done [#allocation4], 128
    $region41: #{_forward_jit.1} parent=1 // pred_fallthru
      _
    %156 = vsyncpa [#allocation3], 1
    %157 = vsyncpa [#allocation6], 1
    %158 = vsyncpa [#allocation4], 1

</llo_original>
